<compile_context>
chip_gen: v7x
topology: tpu7x:2x2x1
jax: 0.10.0
libtpu: 0.0.40
codegen_flags: <defaults>
</compile_context>

<pallas_src>
import jax
import jax.numpy as jnp
from jax.experimental import pallas as pl
from jax.experimental.pallas import tpu as pltpu


def _round_up(x, m):
    return ((x + m - 1) // m) * m


def _cdiv(a, b):
    return -(-a // b)


_BIG = 1e30  # padded-cluster sentinel; c2/logit math stays pinned to f32


# ----------------------------------------------------------------------------
# Kernel
# ----------------------------------------------------------------------------
def _make_kernel(D, td, nd, ragged_d):
    """Kernel for one (row-tile i, D-block k) grid step.

    x_ref:   (TM, td)  tile of cells (bf16/f32, fed straight to the MXU)
    cdk_ref: (td, Kp)  2*centroids^T block, zero-padded along K (and D)
    c2_ref:  (1,  Kp)  ||c||^2 per centroid (f32); padded entries hold +BIG
    o_ref:   (TM, Kp)  soft assignments for this tile (padded cols -> exactly 0)
    acc_ref: (TM, Kp)  f32 accumulator for 2*x.c across D blocks
    """

    def kernel(x_ref, cdk_ref, c2_ref, o_ref, acc_ref):
        k = pl.program_id(1)

        @pl.when(k == 0)
        def _():
            acc_ref[...] = jnp.zeros_like(acc_ref)

        x = x_ref[...]
        if ragged_d:
            # Last D block is ragged: zero columns past D so whatever lives in
            # the Pallas-padded tail (stale VMEM / NaN poison) cannot
            # contaminate the reduction.
            col = jax.lax.broadcasted_iota(jnp.int32, x.shape, 1) + k * td
            x = jnp.where(col < D, x, jnp.zeros_like(x))

        # MXU cross-term with f32 accumulation; centroids were pre-scaled by 2
        # in the wrapper, so acc accumulates 2 * x . c.
        acc_ref[...] += jnp.dot(x, cdk_ref[...],
                                preferred_element_type=jnp.float32)

        @pl.when(k == nd - 1)
        def _():
            # softmax(-(||x||^2 + ||c||^2 - 2 x.c)) == softmax(2 x.c - ||c||^2)
            # (per-row ||x||^2 cancels).  Padded clusters carry c2 = +BIG so
            # exp() underflows to exactly 0 for them.
            logits = acc_ref[...] - c2_ref[...]
            m = jnp.max(logits, axis=-1, keepdims=True)
            e = jnp.exp(logits - m)
            denom = jnp.sum(e, axis=-1, keepdims=True)
            # Exact divide (approx reciprocal broke the rows-sum-to-1 check).
            o_ref[...] = (e / denom).astype(o_ref.dtype)

    return kernel


# ----------------------------------------------------------------------------
# Wrapper
# ----------------------------------------------------------------------------
def _block_spec(shape, index_map, n_buffers=None):
    """BlockSpec with optional buffer-count override (graceful fallback)."""
    if n_buffers is not None and hasattr(pl, "Buffered"):
        try:
            return pl.BlockSpec(shape, index_map,
                                pipeline_mode=pl.Buffered(n_buffers))
        except TypeError:  # BlockSpec without pipeline_mode support
            pass
    return pl.BlockSpec(shape, index_map)


def _default_vmem_limit_bytes():
    # Generation-aware budget: ~60% of physical VMEM (≈38 MiB on v7x's 64 MiB,
    # ≈77 MiB on v5e/v6e's 128 MiB); conservative fallback if unqueryable.
    try:
        cap = pltpu.get_tpu_info().vmem_capacity_bytes
        return min(int(cap * 0.6), 96 * 1024 * 1024)
    except Exception:
        return 40 * 1024 * 1024


def ace_forward(x, centroids, *, tm=512, td=None, vmem_limit_bytes=None,
                cast_to_bf16=True, out_dtype=jnp.float32, trim_output=True):
    """x: (N, D) cells, centroids: (K, D) -> (N, K) soft assignments."""
    N, D = x.shape
    K, Dc = centroids.shape
    assert D == Dc, "feature dims of x and centroids must match"

    if vmem_limit_bytes is None:
        vmem_limit_bytes = _default_vmem_limit_bytes()

    # --- dtype: halve the dominant HBM stream; bf16-native MXU on v6e/v7x ---
    if cast_to_bf16 and x.dtype == jnp.float32:
        x = x.astype(jnp.bfloat16)
    if cast_to_bf16 and centroids.dtype == jnp.float32:
        centroids = centroids.astype(jnp.bfloat16)

    x_item = jnp.dtype(x.dtype).itemsize
    c_item = jnp.dtype(centroids.dtype).itemsize
    o_item = jnp.dtype(out_dtype).itemsize

    Kp = _round_up(max(K, 1), 128)            # lane-dense output width
    budget = 0.75 * vmem_limit_bytes

    def est(tm_, td_, nd_):
        return (2 * tm_ * td_ * x_item                        # x tile (2 bufs)
                + (1 if nd_ == 1 else 2) * td_ * Kp * c_item  # centroids^T
                + 2 * Kp * 4                                  # ||c||^2
                + 2 * tm_ * Kp * o_item                       # out tile (2 bufs)
                + tm_ * Kp * 4                                # f32 accumulator
                + 2 * tm_ * Kp * 4)                           # softmax temps

    # --- tile sizing: big MXU-friendly row tiles; split D before tm < 256 ---
    tm = min(int(tm), _round_up(N, 8))
    tm = _round_up(tm, 8)
    if tm >= 256:
        tm = (tm // 128) * 128

    if td is None:
        td_, nd = D, 1
        while tm > 256 and est(tm, td_, nd) > budget:          # shrink tm to 256
            tm = max(256, ((tm // 2) // 128) * 128)
        while est(tm, td_, nd) > budget and td_ > 512:         # then split D
            td_ = max(512, ((td_ // 2) // 128) * 128)
            nd = _cdiv(D, td_)
        while tm > 128 and est(tm, td_, nd) > budget:          # last resort
            tm = max(128, ((tm // 2) // 128) * 128)
    else:
        td_ = int(td)
        nd = _cdiv(D, td_)

    # v7x has 2 TensorCores: make sure the "parallel" row axis has >= 2
    # programs for large-enough N so both cores get work.
    if _cdiv(N, tm) < 2 and N >= 256:
        tm = _round_up(_cdiv(N, 2), 128)

    ragged_d = (nd > 1) and (D % td_ != 0)
    Dp = nd * td_

    # --- hoisted centroid-side work (once, outside the grid loop) -----------
    c_f32 = centroids.astype(jnp.float32)
    c2 = jnp.sum(c_f32 * c_f32, axis=-1)                              # (K,) f32
    c2_pad = jnp.full((1, Kp), _BIG, dtype=jnp.float32).at[0, :K].set(c2)
    # factor of 2 folded into the centroids -> one fewer VPU multiply per step;
    # zero padding along D neutralizes the ragged last D block.
    c_dk = jnp.zeros((Dp, Kp), centroids.dtype)
    c_dk = c_dk.at[:D, :K].set((2.0 * c_f32).astype(centroids.dtype).T)

    grid = (_cdiv(N, tm), nd)

    in_specs = [
        pl.BlockSpec((tm, td_), lambda i, k: (i, k)),               # x row tile
        _block_spec((td_, Kp), lambda i, k: (k, 0),
                    n_buffers=1 if nd == 1 else None),              # 2*centroids^T
        _block_spec((1, Kp), lambda i, k: (0, 0), n_buffers=1),     # ||c||^2
    ]
    out_specs = pl.BlockSpec((tm, Kp), lambda i, k: (i, 0))

    out = pl.pallas_call(
        _make_kernel(D, td_, nd, ragged_d),
        out_shape=jax.ShapeDtypeStruct((N, Kp), out_dtype),    # N left unpadded
        grid_spec=pltpu.PrefetchScalarGridSpec(
            num_scalar_prefetch=0,
            grid=grid,
            in_specs=in_specs,
            out_specs=out_specs,
            scratch_shapes=[pltpu.VMEM((tm, Kp), jnp.float32)],
        ),
        compiler_params=pltpu.CompilerParams(
            dimension_semantics=("parallel", "arbitrary"),
            vmem_limit_bytes=int(vmem_limit_bytes),
        ),
    )(x, c_dk, c2_pad)

    if trim_output and Kp != K:
        out = out[:, :K]   # only column trim remains; caller may skip it
    return out


# ----------------------------------------------------------------------------
# Reference + tests
# ----------------------------------------------------------------------------
def ace_reference(x, centroids):
    """Pure-JAX f32 reference: softmax over negative squared distances."""
    x = x.astype(jnp.float32)
    c = centroids.astype(jnp.float32)
    d2 = (jnp.sum(x * x, axis=-1, keepdims=True)
          + jnp.sum(c * c, axis=-1)[None, :]
          - 2.0 * (x @ c.T))
    return jax.nn.softmax(-d2, axis=-1)


def _bf16_round(a):
    return a.astype(jnp.bfloat16).astype(jnp.float32)


def _check(name, out, x_used, c_used, atol=2e-3, rtol=2e-3):
    ref = ace_reference(x_used, c_used)
    assert out.shape == ref.shape, (name, out.shape, ref.shape)
    out32 = out.astype(jnp.float32)
    s = jnp.sum(out32, axis=-1)
    assert jnp.allclose(s, 1.0, atol=atol), (
        name, "rowsum", float(jnp.max(jnp.abs(s - 1.0))))
    assert jnp.allclose(out32, ref, atol=atol, rtol=rtol), (
        name, "value", float(jnp.max(jnp.abs(out32 - ref))))


if __name__ == "__main__":
    key = jax.random.PRNGKey(0)
    ks = jax.random.split(key, 8)

    # Case 1: n_clusts=4 ClusterModules, n_dims=32, 16 cells.
    N, D, K = 16, 32, 4
    x = jax.random.normal(ks[0], (N, D), dtype=jnp.float32)
    c = jax.random.normal(ks[1], (K, D), dtype=jnp.float32)   # stacked `.coords`
    out = jax.block_until_ready(ace_forward(x, c))
    _check("case1", out, _bf16_round(x), _bf16_round(c))

    # Case 2: padding paths (N not a multiple of 8, K != 4).
    N, D, K = 30, 48, 6
    x = jax.random.normal(ks[2], (N, D), dtype=jnp.float32)
    c = jax.random.normal(ks[3], (K, D), dtype=jnp.float32)
    out = jax.block_until_ready(ace_forward(x, c))
    _check("case2", out, _bf16_round(x), _bf16_round(c))

    # Case 3: multiple row tiles with a ragged last tile (no host-side x pad).
    N, D, K = 300, 256, 10
    x = jax.random.normal(ks[4], (N, D), dtype=jnp.float32)
    c = jax.random.normal(ks[5], (K, D), dtype=jnp.float32)
    out = jax.block_until_ready(ace_forward(x, c))
    _check("case3", out, _bf16_round(x), _bf16_round(c))

    # Case 4: forced D-reduction split with a ragged last D block.
    N, D, K = 64, 320, 5
    x = jax.random.normal(ks[6], (N, D), dtype=jnp.float32)
    c = jax.random.normal(ks[7], (K, D), dtype=jnp.float32)
    out = jax.block_until_ready(ace_forward(x, c, td=128))
    _check("case4", out, _bf16_round(x), _bf16_round(c))

    # Case 5: bf16 output (halves the Kp-wide HBM write stream).
    out_bf = jax.block_until_ready(ace_forward(x, c, out_dtype=jnp.bfloat16))
    _check("case5", out_bf, _bf16_round(x), _bf16_round(c), atol=1e-2, rtol=1e-2)

    print("KERNEL_OK")
</pallas_src>

<mosaic_0001>
module attributes {stable_mosaic.version = 11 : i64} {
  func.func @kernel(%arg0: i32, %arg1: i32, %arg2: memref<16x32xbf16, #tpu.memory_space<vmem>>, %arg3: memref<32x128xbf16, #tpu.memory_space<vmem>>, %arg4: memref<1x128xf32, #tpu.memory_space<vmem>>, %arg5: memref<16x128xf32, #tpu.memory_space<vmem>>, %arg6: memref<16x128xf32, #tpu.memory_space<vmem>>) attributes {dimension_semantics = [#tpu.dimension_semantics<parallel>, #tpu.dimension_semantics<arbitrary>], iteration_bounds = array<i64: 1, 1>, scalar_prefetch = 0 : i64, scratch_operands = 1 : i64, tpu.core_type = #tpu.core_type<tc>, window_params = [{transform_indices = @transform_0, window_bounds = array<i64: 16, 32>}, {pipeline_mode = #tpu.pipeline_mode<synchronous>, transform_indices = @transform_1, window_bounds = array<i64: 32, 128>}, {pipeline_mode = #tpu.pipeline_mode<synchronous>, transform_indices = @transform_2, window_bounds = array<i64: 1, 128>}, {transform_indices = @transform_3, window_bounds = array<i64: 16, 128>}]} {
    %c0_i32 = arith.constant 0 : i32
    %0 = arith.cmpi eq, %arg1, %c0_i32 : i32
    %1 = arith.extui %0 : i1 to i32
    %c0_i32_0 = arith.constant 0 : i32
    %2 = arith.cmpi ne, %1, %c0_i32_0 : i32
    scf.if %2 {
      %cst_10 = arith.constant 0.000000e+00 : f32
      %12 = vector.broadcast %cst_10 : f32 to vector<16x128xf32>
      %c0_11 = arith.constant 0 : index
      %c0_12 = arith.constant 0 : index
      %13 = vector.load %arg6[%c0_11, %c0_12] : memref<16x128xf32, #tpu.memory_space<vmem>>, vector<16x128xf32>
      tpu.vector_store %arg6[%c0_11, %c0_12], %12 {strides = array<i32>} : memref<16x128xf32, #tpu.memory_space<vmem>>, vector<16x128xf32>,
    } else {
    }
    %c0 = arith.constant 0 : index
    %c0_1 = arith.constant 0 : index
    %3 = vector.load %arg2[%c0, %c0_1] : memref<16x32xbf16, #tpu.memory_space<vmem>>, vector<16x32xbf16>
    %c0_2 = arith.constant 0 : index
    %c0_3 = arith.constant 0 : index
    %4 = vector.load %arg6[%c0_2, %c0_3] : memref<16x128xf32, #tpu.memory_space<vmem>>, vector<16x128xf32>
    %c0_4 = arith.constant 0 : index
    %c0_5 = arith.constant 0 : index
    %5 = vector.load %arg3[%c0_4, %c0_5] : memref<32x128xbf16, #tpu.memory_space<vmem>>, vector<32x128xbf16>
    %cst = arith.constant dense<0.000000e+00> : vector<16x128xf32>
    %6 = tpu.matmul %3, %5, %cst {dimension_numbers = #tpu.dot_dimension_numbers<[1], [0], [0], [1], [0, 0, 1, 1], [], []>} : vector<16x32xbf16>, vector<32x128xbf16>, vector<16x128xf32> -> vector<16x128xf32>
    %7 = arith.addf %4, %6 : vector<16x128xf32>
    %c0_6 = arith.constant 0 : index
    %c0_7 = arith.constant 0 : index
    %8 = vector.load %arg6[%c0_6, %c0_7] : memref<16x128xf32, #tpu.memory_space<vmem>>, vector<16x128xf32>
    tpu.vector_store %arg6[%c0_6, %c0_7], %7 {strides = array<i32>} : memref<16x128xf32, #tpu.memory_space<vmem>>, vector<16x128xf32>,
    %c0_i32_8 = arith.constant 0 : i32
    %9 = arith.cmpi eq, %arg1, %c0_i32_8 : i32
    %10 = arith.extui %9 : i1 to i32
    %c0_i32_9 = arith.constant 0 : i32
    %11 = arith.cmpi ne, %10, %c0_i32_9 : i32
    scf.if %11 {
      %c0_10 = arith.constant 0 : index
      %c0_11 = arith.constant 0 : index
      %12 = vector.load %arg6[%c0_10, %c0_11] : memref<16x128xf32, #tpu.memory_space<vmem>>, vector<16x128xf32>
      %c0_12 = arith.constant 0 : index
      %c0_13 = arith.constant 0 : index
      %13 = vector.load %arg4[%c0_12, %c0_13] : memref<1x128xf32, #tpu.memory_space<vmem>>, vector<1x128xf32>
      %14 = vector.broadcast %13 : vector<1x128xf32> to vector<16x128xf32>
      %15 = arith.subf %12, %14 : vector<16x128xf32>
      %cst_14 = arith.constant dense<0xFF800000> : vector<16xf32>
      %16 = vector.multi_reduction <maximumf>, %15, %cst_14 [1] : vector<16x128xf32> to vector<16xf32>
      %17 = vector.shape_cast %16 : vector<16xf32> to vector<16x1xf32>
      %18 = vector.broadcast %17 : vector<16x1xf32> to vector<16x128xf32>
      %19 = arith.subf %15, %18 : vector<16x128xf32>
      %20 = math.exp %19 : vector<16x128xf32>
      %cst_15 = arith.constant dense<0.000000e+00> : vector<16xf32>
      %21 = vector.multi_reduction <add>, %20, %cst_15 [1] : vector<16x128xf32> to vector<16xf32>
      %22 = vector.shape_cast %21 : vector<16xf32> to vector<16x1xf32>
      %23 = vector.broadcast %22 : vector<16x1xf32> to vector<16x128xf32>
      %24 = arith.divf %20, %23 : vector<16x128xf32>
      %c0_16 = arith.constant 0 : index
      %c0_17 = arith.constant 0 : index
      %25 = vector.load %arg5[%c0_16, %c0_17] : memref<16x128xf32, #tpu.memory_space<vmem>>, vector<16x128xf32>
      tpu.vector_store %arg5[%c0_16, %c0_17], %24 {strides = array<i32>} : memref<16x128xf32, #tpu.memory_space<vmem>>, vector<16x128xf32>,
    } else {
    }
    return
  }
  func.func @transform_0(%arg0: i32, %arg1: i32) -> (i32, i32) {
    %c0_i32 = arith.constant 0 : i32
    return %arg0, %arg1 : i32, i32
  }
  func.func @transform_1(%arg0: i32, %arg1: i32) -> (i32, i32) {
    %c0_i32 = arith.constant 0 : i32
    %c0_i32_0 = arith.constant 0 : i32
    return %arg1, %c0_i32 : i32, i32
  }
  func.func @transform_2(%arg0: i32, %arg1: i32) -> (i32, i32) {
    %c0_i32 = arith.constant 0 : i32
    %c0_i32_0 = arith.constant 0 : i32
    %c0_i32_1 = arith.constant 0 : i32
    return %c0_i32, %c0_i32_0 : i32, i32
  }
  func.func @transform_3(%arg0: i32, %arg1: i32) -> (i32, i32) {
    %c0_i32 = arith.constant 0 : i32
    %c0_i32_0 = arith.constant 0 : i32
    return %arg0, %c0_i32 : i32, i32
  }
}

</mosaic_0001>

<llo_original>
// kernel: tpu_custom_call.1
$region0: #{tpu_custom_call.1}
  #allocation0 [shape = 'u32[]', space=smem, size = 0x4, offset = 0x4, fixed_abs, tag = 'smem constant byte address 0x4 - core index']
  #allocation1 [shape = 'u32[144,128]{1,0:T(1,128)}', space=vmem, size = 0x12000, scoped, tag = 'internal scratch']
  #allocation2 [shape = 'f32[16,128]{1,0:T(8,128)}', space=vmem, size = 0x2000, scoped, tag = 'scratch operand']
  %s0 = inlined_call_operand.hbm [shape: bf16[16,32], index: 0, kind: input, shape index: {}]
  %s1 = inlined_call_operand.hbm [shape: bf16[32,128], index: 1, kind: input, shape index: {}]
  %s2 = inlined_call_operand.vmem [shape: f32[1,128], index: 2, kind: input, shape index: {}]
  %s3 = inlined_call_operand.hbm [shape: f32[16,128], index: 3, kind: output, shape index: {}]
  %s4 = sld [smem:[#allocation0]]
  $region38: #{tpu_custom_call.1} parent=0
    _
  %s6 = ssub.s32 1, %s4
  %s7 = scalar_select 0, %s6, %s4
  $region1: #{tpu_custom_call.1} parent=0
    #allocation3 [shape = 'u8[4096]{0}', space=vmem, size = 0x1000, scoped, tag = 'input window, operand 0, single buffered']
    #allocation4 [shape = 's32[1]{0}', space=sflag, size = 0x4, scoped, tag = 'scoped memory for tpu_custom_call.1']
    #allocation5 [shape = 's32[1]{0}', space=sflag, size = 0x4, scoped, tag = 'scoped memory for tpu_custom_call.1']
    #allocation6 [shape = 'u8[8192]{0}', space=vmem, size = 0x2000, scoped, tag = 'input window, operand 1, single buffered']
    #allocation7 [shape = 's32[1]{0}', space=sflag, size = 0x4, scoped, tag = 'scoped memory for tpu_custom_call.1']
    #allocation8 [shape = 'u8[8192]{0}', space=vmem, size = 0x2000, scoped, tag = 'output window, operand 0, single buffered']
    %8 = vsyncpa [#allocation4], 0
    %9 = vsyncpa [#allocation7], 0
    %10 = vsyncpa [#allocation5], 0
    // Predicated region
    $region2: #{tpu_custom_call.1} parent=1 // pred_check
      _
    $region3: #{tpu_custom_call.1} parent=1 // pred_check_branch
      %12 = sbr.rel (0) target = $region5
    $region4: #{tpu_custom_call.1} parent=1 // pred_region
      %s14 = ssub.s32 128, 128
      %15 = vsyncadd [#allocation4], %s14
      %s16 = sshll.u32 [#allocation3], 4
      %s17 = int_to_ptr.vmem [resolvable:$true] %s16
      %22 = dma.hbm_to_vmem [thread:$0]  %s0, 128, %s17, [#allocation4], 64, 64, 4
    $region5: #{tpu_custom_call.1} parent=1 // pred_fallthru
      _
    // Predicated region
    $region6: #{tpu_custom_call.1} parent=1 // pred_check
      _
    $region7: #{tpu_custom_call.1} parent=1 // pred_check_branch
      %24 = sbr.rel (0) target = $region9
    $region8: #{tpu_custom_call.1} parent=1 // pred_region
      %s26 = ssub.s32 256, 256
      %27 = vsyncadd [#allocation7], %s26
      %s28 = sshll.u32 [#allocation6], 4
      %s29 = int_to_ptr.vmem [resolvable:$true] %s28
      %34 = dma.hbm_to_vmem [thread:$0]  %s1, 256, %s29, [#allocation7], 64, 64, 4
    $region9: #{tpu_custom_call.1} parent=1 // pred_fallthru
      _
    // Predicated region
    $region10: #{tpu_custom_call.1} parent=1 // pred_check
      _
    $region11: #{tpu_custom_call.1} parent=1 // pred_check_branch
      %36 = sbr.rel (0) target = $region13
    $region12: #{tpu_custom_call.1} parent=1 // pred_region
      _
    $region13: #{tpu_custom_call.1} parent=1 // pred_fallthru
      _
    // Predicated region
    $region14: #{tpu_custom_call.1} parent=1 // pred_check
      _
    $region15: #{tpu_custom_call.1} parent=1 // pred_check_branch
      %38 = sbr.rel (0) target = $region17
    $region16: #{tpu_custom_call.1} parent=1 // pred_region
      %39 = dma.done [#allocation4], 128
    $region17: #{tpu_custom_call.1} parent=1 // pred_fallthru
      _
    // Predicated region
    $region18: #{tpu_custom_call.1} parent=1 // pred_check
      _
    $region19: #{tpu_custom_call.1} parent=1 // pred_check_branch
      %41 = sbr.rel (0) target = $region21
    $region20: #{tpu_custom_call.1} parent=1 // pred_region
      %42 = dma.done [#allocation7], 256
    $region21: #{tpu_custom_call.1} parent=1 // pred_fallthru
      _
    %p44 = scmp.eq.s32.totalorder 0, 0
    // Predicated region
    $region22: #{tpu_custom_call.1} parent=1 // pred_check
      %p45 = pneg %p44
    $region23: #{tpu_custom_call.1} parent=1 // pred_check_branch
      %47 = sbr.rel (%p45) target = $region25
    $region24: #{tpu_custom_call.1} parent=1 // pred_region
      %48 = vst [vmem:[#allocation2] sm:$0xff] 0.0
      %49 = vst [vmem:[#allocation2 + $0x8] sm:$0xff] 0.0
    $region25: #{tpu_custom_call.1} parent=1 // pred_fallthru
      _
    %v50 = vld [vmem:[#allocation3] sm:$0xf]
    %v51 = vld [vmem:[#allocation3 + $0x4] sm:$0xf]
    %v52 = vld [vmem:[#allocation2] sm:$0xff]
    %v53 = vld [vmem:[#allocation2 + $0x8] sm:$0xff]
    %v54 = vld [vmem:[#allocation6] sm:$0xf]
    %v55 = vld [vmem:[#allocation6 + $0x4] sm:$0xf]
    %v56 = vld [vmem:[#allocation6 + $0x8] sm:$0xf]
    %v57 = vld [vmem:[#allocation6 + $0xc] sm:$0xf]
    %v60 = vunpack.c.l.b16 %v50
    %v61 = vunpack.c.l.b16 %v51
    %v62 = vpack.c.b16 %v61, %v60
    %v67 = vunpack.c.l.b16 %v54
    %v68 = vunpack.c.l.b16 %v55
    %v69 = vunpack.c.l.b16 %v56
    %v70 = vunpack.c.l.b16 %v57
    %v71 = vpack.c.b16 %v68, %v67
    %v72 = vpack.c.b16 %v70, %v69
    %vm75 = vcmask 261120
    %v77 = vsel %vm75, %v62, 0
    %79 = vmatprep.subr.bf16.mxu0 0
    %80 = vmatpush1.bf16.msra.mxu0 %v71
    %81 = vmatprep.subr.bf16.mxu0 0
    %82 = vmatpush1.bf16.msra.mxu0 %v72
    %83 = vmatprep.subr.bf16.mxu0 0
    %84 = vmatpush1.bf16.msra.mxu0 0
    %85 = vmatprep.subr.bf16.mxu0 0
    %86 = vmatpush1.bf16.msra.mxu0 0
    %87 = vmatprep.subr.bf16.mxu0 0
    %88 = vmatpush1.bf16.msra.mxu0 0
    %89 = vmatprep.subr.bf16.mxu0 0
    %90 = vmatpush1.bf16.msra.mxu0 0
    %91 = vmatprep.subr.bf16.mxu0 0
    %92 = vmatpush1.bf16.msra.mxu0 0
    %93 = vmatprep.subr.bf16.mxu0 0
    %94 = vmatpush1.bf16.msra.mxu0 0
    %95 = vmatprep.subr.bf16.mxu0 0
    %96 = vmatpush1.bf16.msra.mxu0 0
    %97 = vmatprep.subr.bf16.mxu0 0
    %98 = vmatpush1.bf16.msra.mxu0 0
    %99 = vmatprep.subr.bf16.mxu0 0
    %100 = vmatpush1.bf16.msra.mxu0 0
    %101 = vmatprep.subr.bf16.mxu0 0
    %102 = vmatpush1.bf16.msra.mxu0 0
    %103 = vmatprep.subr.bf16.mxu0 0
    %104 = vmatpush1.bf16.msra.mxu0 0
    %105 = vmatprep.subr.bf16.mxu0 0
    %106 = vmatpush1.bf16.msra.mxu0 0
    %107 = vmatprep.subr.bf16.mxu0 0
    %108 = vmatpush1.bf16.msra.mxu0 0
    %109 = vmatprep.subr.bf16.mxu0 0
    %110 = vmatpush1.bf16.msra.mxu0 0
    %111 = vmatprep.mubr.bf16.mxu0 0
    %112 = vmatmul.mubr.bf16.gmra.mrb[0].mxu0 %v77
    %v113 = vpop.f32.mrb[0].mxu0
    %v114 = vadd.f32 0.0, %v113
    %v115 = vpop.f32.mrb[0].mxu0
    %v116 = vpop.f32.mrb[0].mxu0
    %v117 = vadd.f32 0.0, %v116
    %v118 = vpop.f32.mrb[0].mxu0
    %119 = vdwg.mxu0
    %v120 = vadd.f32 %v52, %v114
    %v121 = vadd.f32 %v53, %v117
    %122 = vst [vmem:[#allocation2] sm:$0xff] %v120
    %123 = vst [vmem:[#allocation2 + $0x8] sm:$0xff] %v121
    // Predicated region
    $region26: #{tpu_custom_call.1} parent=1 // pred_check
      %p124 = pneg %p44
    $region27: #{tpu_custom_call.1} parent=1 // pred_check_branch
      %126 = sbr.rel (%p124) target = $region29
    $region28: #{tpu_custom_call.1} parent=1 // pred_region
      %v127 = vld [vmem:[#allocation2] sm:$0xff]
      %v128 = vld [vmem:[#allocation2 + $0x8] sm:$0xff]
      %v129 = vld [vmem:[%s2] sm:$0x1]
      %v131 = vlaneseq
      %v132 = vshrl.u32 %v131, 7
      %v133 = vsub.s32 0, %v132
      %v134 = vrot.slane %v129, %v133
      %v136 = vsub.f32 %v127, %v134
      %v137 = vsub.f32 %v128, %v134
      %138 = vmax.xlane.f32.xlu0 %v136
      %v139 = vpop.xlane.xlu0 %138
      %140 = vmax.xlane.f32.xlu0 %v137
      %v141 = vpop.xlane.xlu0 %140
      %v142 = vsub.f32 %v136, %v139
      %v143 = vsub.f32 %v137, %v141
      %v144 = vmul.f32 %v142, 1.442695
      %v145 = vpow.pop %v144
      %v146 = vmul.f32 %v143, 1.442695
      %v147 = vpow.pop %v146
      %148 = vadd.xlane.f32.xlu0 %v145
      %v149 = vpop.xlane.xlu0 %148
      %150 = vadd.xlane.f32.xlu0 %v147
      %v151 = vpop.xlane.xlu0 %150
      %v152 = vrcp.pop %v149
      %v153 = vmul.f32 %v145, %v152
      %v154 = vrcp.pop %v151
      %v155 = vmul.f32 %v147, %v154
      %156 = vst [vmem:[#allocation8] sm:$0xff] %v153
      %157 = vst [vmem:[#allocation8 + $0x8] sm:$0xff] %v155
    $region29: #{tpu_custom_call.1} parent=1 // pred_fallthru
      _
    // Predicated region
    $region30: #{tpu_custom_call.1} parent=1 // pred_check
      _
    $region31: #{tpu_custom_call.1} parent=1 // pred_check_branch
      %159 = sbr.rel (0) target = $region33
    $region32: #{tpu_custom_call.1} parent=1 // pred_region
      %s161 = ssub.s32 256, 256
      %162 = vsyncadd [#allocation5], %s161
      %s163 = sshll.u32 [#allocation8], 4
      %s164 = int_to_ptr.vmem [resolvable:$true] %s163
      %169 = dma.vmem_to_hbm [thread:$0]  %s164, 256, %s3, [#allocation5], 128, 128, 8
    $region33: #{tpu_custom_call.1} parent=1 // pred_fallthru
      _
    // Predicated region
    $region34: #{tpu_custom_call.1} parent=1 // pred_check
      _
    $region35: #{tpu_custom_call.1} parent=1 // pred_check_branch
      %171 = sbr.rel (0) target = $region37
    $region36: #{tpu_custom_call.1} parent=1 // pred_region
      %172 = dma.done [#allocation5], 256
    $region37: #{tpu_custom_call.1} parent=1 // pred_fallthru
      _
    %173 = vsyncpa [#allocation4], 1
    %174 = vsyncpa [#allocation7], 1
    %175 = vsyncpa [#allocation5], 1

</llo_original>
